<compile_context>
chip_gen: v5e
topology: v5e:2x2
jax: 0.10.0
libtpu: 0.0.40
codegen_flags: <defaults>
</compile_context>

<pallas_src>
import functools

import jax
import jax.numpy as jnp
import numpy as np
from jax.experimental import pallas as pl
from jax.experimental.pallas import tpu as pltpu


def _normalize_kernel(x_ref, mean_ref, sd_ref, o_ref):
    # x_ref: (tm, tn) block, mean_ref/sd_ref: (tm, 1) per-row constants.
    x = x_ref[...].astype(jnp.float32)
    o_ref[...] = ((x - mean_ref[...]) / sd_ref[...]).astype(o_ref.dtype)


def _choose_tiles(M, N, dtype_bytes, target_tile_bytes=2 << 20):
    """Pick a (tm, tn) tile: lane-dense, dtype-packing aligned, ~2 MiB/block."""
    # Lane (minor) tile: full N if small, otherwise a multiple of 128 up to 2048.
    if N <= 128:
        tn = N
    else:
        tn = min((N // 128) * 128, 2048)
    # Sublane tile: respect sub-32-bit packing (f32 -> 8, bf16 -> 16, int8 -> 32).
    sub = max(8, 32 // dtype_bytes)
    if M <= sub:
        tm = M
    else:
        tm = max(sub, min(M, target_tile_bytes // (tn * dtype_bytes)))
        tm = (tm // sub) * sub
    return tm, tn


def normalize_layer(x, means, sds):
    """Pallas equivalent of PyTorch NormalizeLayer.forward on NCHW input."""
    B, C, H, W = x.shape
    M = B * C
    N = H * W

    x2 = x.reshape(M, N)

    means32 = jnp.asarray(means, jnp.float32)
    sds32 = jnp.asarray(sds, jnp.float32)
    # Row r of x2 corresponds to channel r % C  -> tile the (C,) constants B times.
    mean_rows = jnp.tile(means32, B).reshape(M, 1)
    sd_rows = jnp.tile(sds32, B).reshape(M, 1)

    dtype_bytes = x.dtype.itemsize
    tm, tn = _choose_tiles(M, N, dtype_bytes)
    grid = (pl.cdiv(M, tm), pl.cdiv(N, tn))

    out2 = pl.pallas_call(
        _normalize_kernel,
        out_shape=jax.ShapeDtypeStruct((M, N), x.dtype),
        grid=grid,
        in_specs=[
            pl.BlockSpec((tm, tn), lambda i, j: (i, j)),
            pl.BlockSpec((tm, 1), lambda i, j: (i, 0)),
            pl.BlockSpec((tm, 1), lambda i, j: (i, 0)),
        ],
        out_specs=pl.BlockSpec((tm, tn), lambda i, j: (i, j)),
        compiler_params=pltpu.CompilerParams(
            dimension_semantics=("parallel", "parallel"),
        ),
    )(x2, mean_rows, sd_rows)

    return out2.reshape(B, C, H, W)


if __name__ == "__main__":
    key = jax.random.PRNGKey(0)
    # Small shapes consistent with the module: batch=2, channels=3, 16x16 images.
    B, C, H, W = 2, 3, 16, 16
    x = jax.random.normal(key, (B, C, H, W), dtype=jnp.float32)
    means = [0.4914, 0.4822, 0.4465]
    sds = [0.2023, 0.1994, 0.2010]

    out = normalize_layer(x, means, sds)
    out = jax.block_until_ready(out)

    m = jnp.asarray(means, jnp.float32).reshape(1, C, 1, 1)
    s = jnp.asarray(sds, jnp.float32).reshape(1, C, 1, 1)
    ref = (x - m) / s

    assert out.shape == ref.shape, (out.shape, ref.shape)
    assert out.dtype == ref.dtype, (out.dtype, ref.dtype)
    np.testing.assert_allclose(np.asarray(out), np.asarray(ref), rtol=1e-6, atol=1e-6)

    print("KERNEL_OK")
</pallas_src>

<mosaic_0001>
module attributes {stable_mosaic.version = 11 : i64} {
  func.func @_normalize_kernel(%arg0: i32, %arg1: i32, %arg2: memref<6x256xf32, #tpu.memory_space<vmem>>, %arg3: memref<6x1xf32, #tpu.memory_space<vmem>>, %arg4: memref<6x1xf32, #tpu.memory_space<vmem>>, %arg5: memref<6x256xf32, #tpu.memory_space<vmem>>) attributes {dimension_semantics = [#tpu.dimension_semantics<parallel>, #tpu.dimension_semantics<parallel>], iteration_bounds = array<i64: 1, 1>, scalar_prefetch = 0 : i64, scratch_operands = 0 : i64, tpu.core_type = #tpu.core_type<tc>, window_params = [{transform_indices = @transform_0, window_bounds = array<i64: 6, 256>}, {transform_indices = @transform_1, window_bounds = array<i64: 6, 1>}, {transform_indices = @transform_2, window_bounds = array<i64: 6, 1>}, {transform_indices = @transform_3, window_bounds = array<i64: 6, 256>}]} {
    %c0 = arith.constant 0 : index
    %c0_0 = arith.constant 0 : index
    %0 = vector.load %arg2[%c0, %c0_0] : memref<6x256xf32, #tpu.memory_space<vmem>>, vector<6x256xf32>
    %c0_1 = arith.constant 0 : index
    %c0_2 = arith.constant 0 : index
    %1 = vector.load %arg3[%c0_1, %c0_2] : memref<6x1xf32, #tpu.memory_space<vmem>>, vector<6x1xf32>
    %2 = vector.broadcast %1 : vector<6x1xf32> to vector<6x256xf32>
    %3 = arith.subf %0, %2 : vector<6x256xf32>
    %c0_3 = arith.constant 0 : index
    %c0_4 = arith.constant 0 : index
    %4 = vector.load %arg4[%c0_3, %c0_4] : memref<6x1xf32, #tpu.memory_space<vmem>>, vector<6x1xf32>
    %5 = vector.broadcast %4 : vector<6x1xf32> to vector<6x256xf32>
    %6 = arith.divf %3, %5 : vector<6x256xf32>
    %c0_5 = arith.constant 0 : index
    %c0_6 = arith.constant 0 : index
    %7 = vector.load %arg5[%c0_5, %c0_6] : memref<6x256xf32, #tpu.memory_space<vmem>>, vector<6x256xf32>
    tpu.vector_store %arg5[%c0_5, %c0_6], %6 {strides = array<i32>} : memref<6x256xf32, #tpu.memory_space<vmem>>, vector<6x256xf32>,
    return
  }
  func.func @transform_0(%arg0: i32, %arg1: i32) -> (i32, i32) {
    %c0_i32 = arith.constant 0 : i32
    return %arg0, %arg1 : i32, i32
  }
  func.func @transform_1(%arg0: i32, %arg1: i32) -> (i32, i32) {
    %c0_i32 = arith.constant 0 : i32
    %c0_i32_0 = arith.constant 0 : i32
    return %arg0, %c0_i32 : i32, i32
  }
  func.func @transform_2(%arg0: i32, %arg1: i32) -> (i32, i32) {
    %c0_i32 = arith.constant 0 : i32
    %c0_i32_0 = arith.constant 0 : i32
    return %arg0, %c0_i32 : i32, i32
  }
  func.func @transform_3(%arg0: i32, %arg1: i32) -> (i32, i32) {
    %c0_i32 = arith.constant 0 : i32
    return %arg0, %arg1 : i32, i32
  }
}

</mosaic_0001>

<llo_original>
// kernel: tpu_custom_call.1
$region0: #{tpu_custom_call.1}
  #allocation0 [shape = 'u32[]', space=smem, size = 0x4, offset = 0x4, fixed_abs, tag = 'smem constant byte address 0x4 - core index']
  #allocation1 [shape = 'u32[72,128]{1,0:T(1,128)}', space=vmem, size = 0x9000, scoped, tag = 'internal scratch']
  %s0 = inlined_call_operand.vmem [shape: f32[6,256], index: 0, kind: input, shape index: {}]
  %s1 = inlined_call_operand.vmem [shape: f32[6,1], index: 1, kind: input, shape index: {}]
  %s2 = inlined_call_operand.vmem [shape: f32[6,1], index: 2, kind: input, shape index: {}]
  %s3 = inlined_call_operand.hbm [shape: f32[6,256], index: 3, kind: output, shape index: {}]
  %s4 = sld [smem:[#allocation0]]
  $region22: #{tpu_custom_call.1} parent=0
    _
  %s6 = ssub.s32 1, %s4
  %s7 = scalar_select 0, %s6, %s4
  $region1: #{tpu_custom_call.1} parent=0
    #allocation2 [shape = 'u8[8192]{0}', space=vmem, size = 0x2000, scoped, tag = 'output window, operand 0, single buffered']
    #allocation3 [shape = 's32[1]{0}', space=sflag, size = 0x4, scoped, tag = 'scoped memory for tpu_custom_call.1']
    %8 = vsyncpa [#allocation3], 0
    // Predicated region
    $region2: #{tpu_custom_call.1} parent=1 // pred_check
      _
    $region3: #{tpu_custom_call.1} parent=1 // pred_check_branch
      %10 = sbr.rel (0) target = $region5
    $region4: #{tpu_custom_call.1} parent=1 // pred_region
      _
    $region5: #{tpu_custom_call.1} parent=1 // pred_fallthru
      _
    // Predicated region
    $region6: #{tpu_custom_call.1} parent=1 // pred_check
      _
    $region7: #{tpu_custom_call.1} parent=1 // pred_check_branch
      %12 = sbr.rel (0) target = $region9
    $region8: #{tpu_custom_call.1} parent=1 // pred_region
      _
    $region9: #{tpu_custom_call.1} parent=1 // pred_fallthru
      _
    // Predicated region
    $region10: #{tpu_custom_call.1} parent=1 // pred_check
      _
    $region11: #{tpu_custom_call.1} parent=1 // pred_check_branch
      %14 = sbr.rel (0) target = $region13
    $region12: #{tpu_custom_call.1} parent=1 // pred_region
      _
    $region13: #{tpu_custom_call.1} parent=1 // pred_fallthru
      _
    %v15 = vld [vmem:[%s0] sm:$0x3f]
    %v16 = vld [vmem:[%s0 + $0x8] sm:$0x3f]
    %v17 = vld [vmem:[%s1] sm:$0x3f]
    %19 = vset.pattern.permute.xlu0 0
    %20 = vperm.xlu0 %19, %v17
    %v21 = vpop.permute.xlu0 %20
    %v23 = vsub.f32 %v15, %v21
    %v24 = vsub.f32 %v16, %v21
    %v25 = vld [vmem:[%s2] sm:$0x3f]
    %27 = vset.pattern.permute.xlu0 0
    %28 = vperm.xlu0 %27, %v25
    %v29 = vpop.permute.xlu0 %28
    %v31 = vrcp.pop %v29
    %v32 = vmul.f32 %v29, %v31
    %v33 = vsub.f32 1.0, %v32
    %v34 = vmul.f32 %v31, %v33
    %v35 = vadd.f32 %v31, %v34
    %vm36 = vweird.f32 %v29
    %vm37 = vweird.f32 %v31
    %vm38 = vmor %vm36, %vm37
    %v39 = vsel %vm38, %v31, %v35
    %v40 = vand.u32 2147483647, %v29
    %vm41 = vcmp.eq.f32.partialorder %v40, 8.507059e+37
    %v42 = vand.u32 %v29, 2147483648
    %v43 = vor.u32 1.1754944e-38, %v42
    %v44 = vsel %vm41, %v43, %v39
    %v45 = vmul.f32 %v23, %v44
    %v46 = vmul.f32 %v24, %v44
    %47 = vst [vmem:[#allocation2] sm:$0x3f] %v45
    %48 = vst [vmem:[#allocation2 + $0x8] sm:$0x3f] %v46
    // Predicated region
    $region14: #{tpu_custom_call.1} parent=1 // pred_check
      _
    $region15: #{tpu_custom_call.1} parent=1 // pred_check_branch
      %50 = sbr.rel (0) target = $region17
    $region16: #{tpu_custom_call.1} parent=1 // pred_region
      %52 = vsyncadd [#allocation3], 0
      %s54 = sshll.u32 [#allocation2], 4
      %s55 = int_to_ptr.vmem [resolvable:$true] %s54
      %s56 = sshll.u32 %s3, 4
      %s57 = int_to_ptr.hbm [resolvable:$true] %s56
      %59 = dma.vmem_to_hbm [thread:$0]  %s55, 256, %s57, [#allocation3]
    $region17: #{tpu_custom_call.1} parent=1 // pred_fallthru
      _
    // Predicated region
    $region18: #{tpu_custom_call.1} parent=1 // pred_check
      _
    $region19: #{tpu_custom_call.1} parent=1 // pred_check_branch
      %61 = sbr.rel (0) target = $region21
    $region20: #{tpu_custom_call.1} parent=1 // pred_region
      %63 = dma.done [#allocation3], 256
    $region21: #{tpu_custom_call.1} parent=1 // pred_fallthru
      _
    %64 = vsyncpa [#allocation3], 1

</llo_original>
